<compile_context>
chip_gen: v7x
topology: tpu7x:2x2x1
jax: 0.10.0
libtpu: 0.0.40
codegen_flags: <defaults>
</compile_context>

<pallas_src>
import jax
import jax.numpy as jnp
from jax.experimental import pallas as pl
from jax.experimental.pallas import tpu as pltpu


# ----------------------------------------------------------------------------
# Fused AttentionLayer kernel (one row-tile of nodes per grid step)
# ----------------------------------------------------------------------------
def _attention_kernel(h1_ref, h2_ref, w_ref, u_ref, emb_ref, alpha_ref):
    h1 = h1_ref[...]                      # (TM, F) f32
    h2 = h2_ref[...]                      # (TM, F) f32
    w = w_ref[...]                        # (F, D)  bf16 (resident across grid)
    u = u_ref[...]                        # (1, D)  f32

    def score(h):
        # MXU matmul: bf16 operands, f32 accumulate; tanh goes to the EUP.
        v = jnp.tanh(jnp.dot(h.astype(jnp.bfloat16), w,
                             preferred_element_type=jnp.float32))      # (TM, D)
        # VPU multiply + lane reduce instead of an MXU (D, 1) matvec.
        return jnp.sum(v * u, axis=-1, keepdims=True) + 1e-6           # (TM, 1)

    s1 = score(h1)
    s2 = score(h2)

    # numerically stable softmax over the 2 modalities (per node)
    m = jnp.maximum(s1, s2)
    p1 = jnp.exp(s1 - m)
    p2 = jnp.exp(s2 - m)
    inv = pl.reciprocal(p1 + p2, approx=False)   # exact: alpha rows sum to 1
    a1 = p1 * inv
    a2 = p2 * inv

    emb_ref[...] = a1 * h1 + a2 * h2                                    # (TM, F)
    alpha_ref[...] = jnp.concatenate([a1, a2], axis=-1)                 # (TM, 2)


def attention_layer(emb_omic1, emb_omic2, w_omega, u_omega, *, block_rows=512):
    """Fused Pallas forward of AttentionLayer. Returns (emb_combined, alpha)."""
    # torch.squeeze on the inputs (no-op for (N, F) inputs)
    h1 = jnp.squeeze(emb_omic1).astype(jnp.float32)
    h2 = jnp.squeeze(emb_omic2).astype(jnp.float32)
    n, f = h1.shape
    d = w_omega.shape[1]

    # Row tile: whole array if small, else a multiple-of-8 block so the
    # (8, 128) sublane rule holds; remainder blocks are handled by cdiv.
    if n <= block_rows:
        tm = n
    else:
        tm = (block_rows // 8) * 8 or 8
    grid = (pl.cdiv(n, tm),)

    w_bf = w_omega.astype(jnp.bfloat16)                 # halve weight DMA bytes
    u_row = jnp.reshape(u_omega, (1, d)).astype(jnp.float32)

    emb, alpha = pl.pallas_call(
        _attention_kernel,
        grid=grid,
        in_specs=[
            pl.BlockSpec((tm, f), lambda i: (i, 0)),    # h1 row tile
            pl.BlockSpec((tm, f), lambda i: (i, 0)),    # h2 row tile
            pl.BlockSpec((f, d), lambda i: (0, 0)),     # w_omega (kept resident)
            pl.BlockSpec((1, d), lambda i: (0, 0)),     # u_omega as a lane row
        ],
        out_specs=[
            pl.BlockSpec((tm, f), lambda i: (i, 0)),
            pl.BlockSpec((tm, 2), lambda i: (i, 0)),
        ],
        out_shape=(
            jax.ShapeDtypeStruct((n, f), jnp.float32),
            jax.ShapeDtypeStruct((n, 2), jnp.float32),
        ),
        compiler_params=pltpu.CompilerParams(
            dimension_semantics=("parallel",)),          # v7x megacore split
    )(h1, h2, w_bf, u_row)
    return emb, alpha


# ----------------------------------------------------------------------------
# Pure-JAX reference (f32) for correctness checking
# ----------------------------------------------------------------------------
def attention_layer_ref(h1, h2, w_omega, u_omega):
    emb = jnp.stack([h1, h2], axis=1)                                   # (N, 2, F)
    v = jnp.tanh(jnp.einsum("nkf,fd->nkd", emb, w_omega))               # (N, 2, D)
    vu = jnp.einsum("nkd,d->nk", v, u_omega[:, 0]) + 1e-6               # (N, 2)
    alpha = jax.nn.softmax(vu, axis=1)
    out = jnp.einsum("nkf,nk->nf", emb, alpha)                          # (N, F)
    return out, alpha


# ----------------------------------------------------------------------------
# Demo
# ----------------------------------------------------------------------------
if __name__ == "__main__":
    key = jax.random.PRNGKey(0)
    N, IN_FEAT, OUT_FEAT = 256, 64, 32
    k1, k2, kw, ku = jax.random.split(key, 4)

    def xavier(k, shape):
        fan_in, fan_out = shape
        lim = (6.0 / (fan_in + fan_out)) ** 0.5
        return jax.random.uniform(k, shape, jnp.float32, -lim, lim)

    emb_omic1 = jax.random.normal(k1, (N, IN_FEAT), jnp.float32)
    emb_omic2 = jax.random.normal(k2, (N, IN_FEAT), jnp.float32)
    w_omega = xavier(kw, (IN_FEAT, OUT_FEAT))
    u_omega = xavier(ku, (OUT_FEAT, 1))

    # block_rows=128 -> grid=(2,) so the row tiling path is exercised too.
    fwd = jax.jit(lambda a, b, w, u: attention_layer(a, b, w, u, block_rows=128))
    emb, alpha = fwd(emb_omic1, emb_omic2, w_omega, u_omega)
    jax.block_until_ready((emb, alpha))

    ref_emb, ref_alpha = attention_layer_ref(emb_omic1, emb_omic2, w_omega, u_omega)

    assert emb.shape == (N, IN_FEAT) and alpha.shape == (N, 2)
    assert bool(jnp.all(jnp.isfinite(emb))) and bool(jnp.all(jnp.isfinite(alpha)))
    assert bool(jnp.allclose(jnp.sum(alpha, axis=-1), 1.0, atol=1e-5))
    # bf16 matmul operands (f32 accumulate) -> loose tolerance vs f32 reference
    assert bool(jnp.allclose(alpha, ref_alpha, atol=5e-2))
    assert bool(jnp.allclose(emb, ref_emb, atol=5e-2))
    print("KERNEL_OK")
</pallas_src>

<mosaic_0001>
module attributes {stable_mosaic.version = 11 : i64} {
  func.func @_attention_kernel(%arg0: i32, %arg1: memref<128x64xf32, #tpu.memory_space<vmem>>, %arg2: memref<128x64xf32, #tpu.memory_space<vmem>>, %arg3: memref<64x32xbf16, #tpu.memory_space<vmem>>, %arg4: memref<1x32xf32, #tpu.memory_space<vmem>>, %arg5: memref<128x64xf32, #tpu.memory_space<vmem>>, %arg6: memref<128x2xf32, #tpu.memory_space<vmem>>) attributes {dimension_semantics = [#tpu.dimension_semantics<parallel>], iteration_bounds = array<i64: 2>, scalar_prefetch = 0 : i64, scratch_operands = 0 : i64, tpu.core_type = #tpu.core_type<tc>, window_params = [{transform_indices = @transform_0, window_bounds = array<i64: 128, 64>}, {transform_indices = @transform_1, window_bounds = array<i64: 128, 64>}, {pipeline_mode = #tpu.pipeline_mode<synchronous>, transform_indices = @transform_2, window_bounds = array<i64: 64, 32>}, {pipeline_mode = #tpu.pipeline_mode<synchronous>, transform_indices = @transform_3, window_bounds = array<i64: 1, 32>}, {transform_indices = @transform_4, window_bounds = array<i64: 128, 64>}, {transform_indices = @transform_5, window_bounds = array<i64: 128, 2>}]} {
    %c0 = arith.constant 0 : index
    %c0_0 = arith.constant 0 : index
    %0 = vector.load %arg1[%c0, %c0_0] : memref<128x64xf32, #tpu.memory_space<vmem>>, vector<128x64xf32>
    %c0_1 = arith.constant 0 : index
    %c0_2 = arith.constant 0 : index
    %1 = vector.load %arg2[%c0_1, %c0_2] : memref<128x64xf32, #tpu.memory_space<vmem>>, vector<128x64xf32>
    %c0_3 = arith.constant 0 : index
    %c0_4 = arith.constant 0 : index
    %2 = vector.load %arg3[%c0_3, %c0_4] : memref<64x32xbf16, #tpu.memory_space<vmem>>, vector<64x32xbf16>
    %c0_5 = arith.constant 0 : index
    %c0_6 = arith.constant 0 : index
    %3 = vector.load %arg4[%c0_5, %c0_6] : memref<1x32xf32, #tpu.memory_space<vmem>>, vector<1x32xf32>
    %4 = arith.truncf %0 : vector<128x64xf32> to vector<128x64xbf16>
    %cst = arith.constant dense<0.000000e+00> : vector<128x32xf32>
    %5 = tpu.matmul %4, %2, %cst {dimension_numbers = #tpu.dot_dimension_numbers<[1], [0], [0], [1], [0, 0, 1, 1], [], []>} : vector<128x64xbf16>, vector<64x32xbf16>, vector<128x32xf32> -> vector<128x32xf32>
    %6 = math.tanh %5 : vector<128x32xf32>
    %7 = vector.broadcast %3 : vector<1x32xf32> to vector<128x32xf32>
    %8 = arith.mulf %6, %7 : vector<128x32xf32>
    %cst_7 = arith.constant dense<0.000000e+00> : vector<128xf32>
    %9 = vector.multi_reduction <add>, %8, %cst_7 [1] : vector<128x32xf32> to vector<128xf32>
    %10 = vector.shape_cast %9 : vector<128xf32> to vector<128x1xf32>
    %cst_8 = arith.constant 9.99999997E-7 : f32
    %11 = vector.broadcast %cst_8 : f32 to vector<128x1xf32>
    %12 = arith.addf %10, %11 : vector<128x1xf32>
    %13 = arith.truncf %1 : vector<128x64xf32> to vector<128x64xbf16>
    %cst_9 = arith.constant dense<0.000000e+00> : vector<128x32xf32>
    %14 = tpu.matmul %13, %2, %cst_9 {dimension_numbers = #tpu.dot_dimension_numbers<[1], [0], [0], [1], [0, 0, 1, 1], [], []>} : vector<128x64xbf16>, vector<64x32xbf16>, vector<128x32xf32> -> vector<128x32xf32>
    %15 = math.tanh %14 : vector<128x32xf32>
    %16 = vector.broadcast %3 : vector<1x32xf32> to vector<128x32xf32>
    %17 = arith.mulf %15, %16 : vector<128x32xf32>
    %cst_10 = arith.constant dense<0.000000e+00> : vector<128xf32>
    %18 = vector.multi_reduction <add>, %17, %cst_10 [1] : vector<128x32xf32> to vector<128xf32>
    %19 = vector.shape_cast %18 : vector<128xf32> to vector<128x1xf32>
    %cst_11 = arith.constant 9.99999997E-7 : f32
    %20 = vector.broadcast %cst_11 : f32 to vector<128x1xf32>
    %21 = arith.addf %19, %20 : vector<128x1xf32>
    %22 = arith.maximumf %12, %21 : vector<128x1xf32>
    %23 = arith.subf %12, %22 : vector<128x1xf32>
    %24 = math.exp %23 : vector<128x1xf32>
    %25 = arith.subf %21, %22 : vector<128x1xf32>
    %26 = math.exp %25 : vector<128x1xf32>
    %27 = arith.addf %24, %26 : vector<128x1xf32>
    %28 = tpu.reciprocal %27 : vector<128x1xf32> -> vector<128x1xf32>
    %29 = arith.mulf %24, %28 : vector<128x1xf32>
    %30 = arith.mulf %26, %28 : vector<128x1xf32>
    %31 = vector.broadcast %29 : vector<128x1xf32> to vector<128x64xf32>
    %32 = arith.mulf %31, %0 : vector<128x64xf32>
    %33 = vector.broadcast %30 : vector<128x1xf32> to vector<128x64xf32>
    %34 = arith.mulf %33, %1 : vector<128x64xf32>
    %35 = arith.addf %32, %34 : vector<128x64xf32>
    %c0_12 = arith.constant 0 : index
    %c0_13 = arith.constant 0 : index
    %36 = vector.load %arg5[%c0_12, %c0_13] : memref<128x64xf32, #tpu.memory_space<vmem>>, vector<128x64xf32>
    tpu.vector_store %arg5[%c0_12, %c0_13], %35 {strides = array<i32>} : memref<128x64xf32, #tpu.memory_space<vmem>>, vector<128x64xf32>,
    %37 = tpu.concatenate %29, %30 in 1 : vector<128x1xf32>, vector<128x1xf32> -> vector<128x2xf32>
    %c0_14 = arith.constant 0 : index
    %c0_15 = arith.constant 0 : index
    %38 = vector.load %arg6[%c0_14, %c0_15] : memref<128x2xf32, #tpu.memory_space<vmem>>, vector<128x2xf32>
    tpu.vector_store %arg6[%c0_14, %c0_15], %37 {strides = array<i32>} : memref<128x2xf32, #tpu.memory_space<vmem>>, vector<128x2xf32>,
    return
  }
  func.func @transform_0(%arg0: i32) -> (i32, i32) {
    %c0_i32 = arith.constant 0 : i32
    %c0_i32_0 = arith.constant 0 : i32
    return %arg0, %c0_i32 : i32, i32
  }
  func.func @transform_1(%arg0: i32) -> (i32, i32) {
    %c0_i32 = arith.constant 0 : i32
    %c0_i32_0 = arith.constant 0 : i32
    return %arg0, %c0_i32 : i32, i32
  }
  func.func @transform_2(%arg0: i32) -> (i32, i32) {
    %c0_i32 = arith.constant 0 : i32
    %c0_i32_0 = arith.constant 0 : i32
    %c0_i32_1 = arith.constant 0 : i32
    return %c0_i32, %c0_i32_0 : i32, i32
  }
  func.func @transform_3(%arg0: i32) -> (i32, i32) {
    %c0_i32 = arith.constant 0 : i32
    %c0_i32_0 = arith.constant 0 : i32
    %c0_i32_1 = arith.constant 0 : i32
    return %c0_i32, %c0_i32_0 : i32, i32
  }
  func.func @transform_4(%arg0: i32) -> (i32, i32) {
    %c0_i32 = arith.constant 0 : i32
    %c0_i32_0 = arith.constant 0 : i32
    return %arg0, %c0_i32 : i32, i32
  }
  func.func @transform_5(%arg0: i32) -> (i32, i32) {
    %c0_i32 = arith.constant 0 : i32
    %c0_i32_0 = arith.constant 0 : i32
    return %arg0, %c0_i32 : i32, i32
  }
}

</mosaic_0001>

<llo_original>
// kernel: _lambda_.1
$region0: #{_lambda_.1}
  #allocation0 [shape = 'u32[]', space=smem, size = 0x4, offset = 0x4, fixed_abs, tag = 'smem constant byte address 0x4 - core index']
  #allocation1 [shape = 'u32[144,128]{1,0:T(1,128)}', space=vmem, size = 0x12000, scoped, tag = 'internal scratch']
  %s0 = inlined_call_operand.vmem [shape: f32[256,64], index: 0, kind: input, shape index: {}]
  %s1 = inlined_call_operand.vmem [shape: f32[256,64], index: 1, kind: input, shape index: {}]
  %s2 = inlined_call_operand.vmem [shape: bf16[64,32], index: 2, kind: input, shape index: {}]
  %s3 = inlined_call_operand.vmem [shape: f32[1,32], index: 3, kind: input, shape index: {}]
  %s4 = inlined_call_operand.vmem [shape: f32[256,64], index: 4, kind: output, shape index: {0}]
  %s5 = inlined_call_operand.vmem [shape: f32[256,2], index: 5, kind: output, shape index: {1}]
  %6 = xla_tuple %s4, %s5
  %s7 = sld [smem:[#allocation0]]
  $region57: #{_lambda_.1} parent=0
    _
  %s9 = ssub.s32 1, %s7
  %s10 = scalar_select 0, %s9, %s7
  loop: start=0, step=1, limit=4
  $region2: #{_lambda_.1} parent=0 // loop_pre_header
    _
  $region3: #{_lambda_.1} parent=0 // loop_header
    %s12 = sphi 0, %s16
    %p13 = scmp.ge.s32.totalorder %s12, 4
    %s22 = sphi 0, %s24
    %s25 = sphi 0, %s22
    %s26 = sphi 0, %s25
    %s42 = sphi 0, %s26
    %s48 = sphi 0, %s50
    %s51 = sphi 0, %s48
    %s52 = sphi 0, %s51
    %s68 = sphi 0, %s52
    %s72 = sphi 0, %s72
    %s74 = sphi 0, %s72
    %s75 = sphi 0, %s74
    %s89 = sphi 0, %s75
    %s93 = sphi 0, %s93
    %s95 = sphi 0, %s93
    %s96 = sphi 0, %s95
    %s110 = sphi 0, %s96
    %s116 = sphi 0, %s118
    %s119 = sphi 0, %s116
    %s120 = sphi 0, %s119
    %s136 = sphi 0, %s120
    %s142 = sphi 0, %s144
    %s145 = sphi 0, %s142
    %s146 = sphi 0, %s145
    %s162 = sphi 0, %s146
  $region4: #{_lambda_.1} parent=0 // loop_header_branch
    %15 = sbr.rel (%p13) target = $region8
  $region5: #{_lambda_.1} parent=0 // loop_body
    %s17 = ssub.s32 %s12, 1
    %s18 = ssub.s32 %s12, 2
    %s19 = sadd.s32 %s12, 1
    %s20 = ssub.s32 %s12, %s19
    %p21 = scmp.eq.s32.totalorder %s20, 0
    %s23 = sadd.s32 %s22, 1
    %s24 = scalar_select %p21, %s22, %s23
    %p27 = pneg %p21
    %p28 = scmp.eq.s32.totalorder %s12, 1
    %p29 = por %p27, %p28
    %p30 = scmp.ne.s32.totalorder %s22, %s25
    %p31 = scmp.eq.s32.totalorder %s12, 0
    %p32 = por %p30, %p31
    %p33 = scmp.ne.s32.totalorder %s22, %s25
    %p34 = scmp.eq.s32.totalorder %s17, 1
    %p35 = por %p33, %p34
    %p36 = scmp.ne.s32.totalorder %s25, %s26
    %p37 = scmp.eq.s32.totalorder %s17, 0
    %p38 = por %p36, %p37
    %p39 = scmp.ne.s32.totalorder %s25, %s26
    %p40 = scmp.eq.s32.totalorder %s18, 1
    %p41 = por %p39, %p40
    %p43 = scmp.ne.s32.totalorder %s26, %s42
    %p44 = scmp.eq.s32.totalorder %s18, 0
    %p45 = por %p43, %p44
    %s46 = ssub.s32 %s12, %s19
    %p47 = scmp.eq.s32.totalorder %s46, 0
    %s49 = sadd.s32 %s48, 1
    %s50 = scalar_select %p47, %s48, %s49
    %p53 = pneg %p47
    %p54 = scmp.eq.s32.totalorder %s12, 1
    %p55 = por %p53, %p54
    %p56 = scmp.ne.s32.totalorder %s48, %s51
    %p57 = scmp.eq.s32.totalorder %s12, 0
    %p58 = por %p56, %p57
    %p59 = scmp.ne.s32.totalorder %s48, %s51
    %p60 = scmp.eq.s32.totalorder %s17, 1
    %p61 = por %p59, %p60
    %p62 = scmp.ne.s32.totalorder %s51, %s52
    %p63 = scmp.eq.s32.totalorder %s17, 0
    %p64 = por %p62, %p63
    %p65 = scmp.ne.s32.totalorder %s51, %s52
    %p66 = scmp.eq.s32.totalorder %s18, 1
    %p67 = por %p65, %p66
    %p69 = scmp.ne.s32.totalorder %s52, %s68
    %p70 = scmp.eq.s32.totalorder %s18, 0
    %p71 = por %p69, %p70
    %s73 = sadd.s32 %s72, 1
    %p76 = scmp.eq.s32.totalorder %s12, 1
    %p77 = scmp.ne.s32.totalorder %s72, %s74
    %p78 = scmp.eq.s32.totalorder %s12, 0
    %p79 = por %p77, %p78
    %p80 = scmp.ne.s32.totalorder %s72, %s74
    %p81 = scmp.eq.s32.totalorder %s17, 1
    %p82 = por %p80, %p81
    %p83 = scmp.ne.s32.totalorder %s74, %s75
    %p84 = scmp.eq.s32.totalorder %s17, 0
    %p85 = por %p83, %p84
    %p86 = scmp.ne.s32.totalorder %s74, %s75
    %p87 = scmp.eq.s32.totalorder %s18, 1
    %p88 = por %p86, %p87
    %p90 = scmp.ne.s32.totalorder %s75, %s89
    %p91 = scmp.eq.s32.totalorder %s18, 0
    %p92 = por %p90, %p91
    %s94 = sadd.s32 %s93, 1
    %p97 = scmp.eq.s32.totalorder %s12, 1
    %p98 = scmp.ne.s32.totalorder %s93, %s95
    %p99 = scmp.eq.s32.totalorder %s12, 0
    %p100 = por %p98, %p99
    %p101 = scmp.ne.s32.totalorder %s93, %s95
    %p102 = scmp.eq.s32.totalorder %s17, 1
    %p103 = por %p101, %p102
    %p104 = scmp.ne.s32.totalorder %s95, %s96
    %p105 = scmp.eq.s32.totalorder %s17, 0
    %p106 = por %p104, %p105
    %p107 = scmp.ne.s32.totalorder %s95, %s96
    %p108 = scmp.eq.s32.totalorder %s18, 1
    %p109 = por %p107, %p108
    %p111 = scmp.ne.s32.totalorder %s96, %s110
    %p112 = scmp.eq.s32.totalorder %s18, 0
    %p113 = por %p111, %p112
    %s114 = ssub.s32 %s12, %s19
    %p115 = scmp.eq.s32.totalorder %s114, 0
    %s117 = sadd.s32 %s116, 1
    %s118 = scalar_select %p115, %s116, %s117
    %p121 = pneg %p115
    %p122 = scmp.eq.s32.totalorder %s12, 1
    %p123 = por %p121, %p122
    %p124 = scmp.ne.s32.totalorder %s116, %s119
    %p125 = scmp.eq.s32.totalorder %s12, 0
    %p126 = por %p124, %p125
    %p127 = scmp.ne.s32.totalorder %s116, %s119
    %p128 = scmp.eq.s32.totalorder %s17, 1
    %p129 = por %p127, %p128
    %p130 = scmp.ne.s32.totalorder %s119, %s120
    %p131 = scmp.eq.s32.totalorder %s17, 0
    %p132 = por %p130, %p131
    %p133 = scmp.ne.s32.totalorder %s119, %s120
    %p134 = scmp.eq.s32.totalorder %s18, 1
    %p135 = por %p133, %p134
    %p137 = scmp.ne.s32.totalorder %s120, %s136
    %p138 = scmp.eq.s32.totalorder %s18, 0
    %p139 = por %p137, %p138
    %s140 = ssub.s32 %s12, %s19
    %p141 = scmp.eq.s32.totalorder %s140, 0
    %s143 = sadd.s32 %s142, 1
    %s144 = scalar_select %p141, %s142, %s143
    %p147 = pneg %p141
    %p148 = scmp.eq.s32.totalorder %s12, 1
    %p149 = por %p147, %p148
    %p150 = scmp.ne.s32.totalorder %s142, %s145
    %p151 = scmp.eq.s32.totalorder %s12, 0
    %p152 = por %p150, %p151
    %p153 = scmp.ne.s32.totalorder %s142, %s145
    %p154 = scmp.eq.s32.totalorder %s17, 1
    %p155 = por %p153, %p154
    %p156 = scmp.ne.s32.totalorder %s145, %s146
    %p157 = scmp.eq.s32.totalorder %s17, 0
    %p158 = por %p156, %p157
    %p159 = scmp.ne.s32.totalorder %s145, %s146
    %p160 = scmp.eq.s32.totalorder %s18, 1
    %p161 = por %p159, %p160
    %p163 = scmp.ne.s32.totalorder %s146, %s162
    %p164 = scmp.eq.s32.totalorder %s18, 0
    %p165 = por %p163, %p164
    %p166 = scmp.le.s32.totalorder 1, %s12
    %p167 = scmp.lt.s32.totalorder %s12, 3
    %p168 = pnand %p166, %p167
    %p169 = pneg %p168
    // Predicated region
    $region9: #{_lambda_.1} parent=5 // pred_check
      _
    $region10: #{_lambda_.1} parent=5 // pred_check_branch
      %171 = sbr.rel (%p168) target = $region12
    $region11: #{_lambda_.1} parent=5 // pred_region
      %s172 = ssub.s32 %s12, 1
      // Predicated region
      $region13: #{_lambda_.1} parent=11 // pred_check
        %p173 = pneg %p85
      $region14: #{_lambda_.1} parent=11 // pred_check_branch
        %175 = sbr.rel (%p173) target = $region16
      $region15: #{_lambda_.1} parent=11 // pred_region
        _
      $region16: #{_lambda_.1} parent=11 // pred_fallthru
        _
      // Predicated region
      $region17: #{_lambda_.1} parent=11 // pred_check
        %p176 = pneg %p106
      $region18: #{_lambda_.1} parent=11 // pred_check_branch
        %178 = sbr.rel (%p176) target = $region20
      $region19: #{_lambda_.1} parent=11 // pred_region
        _
      $region20: #{_lambda_.1} parent=11 // pred_fallthru
        _
    $region12: #{_lambda_.1} parent=5 // pred_fallthru
      _
    %p179 = scmp.lt.s32.totalorder %s12, 2
    // Predicated region
    $region21: #{_lambda_.1} parent=5 // pred_check
      %p180 = pneg %p179
    $region22: #{_lambda_.1} parent=5 // pred_check_branch
      %182 = sbr.rel (%p180) target = $region24
    $region23: #{_lambda_.1} parent=5 // pred_region
      // Predicated region
      $region25: #{_lambda_.1} parent=23 // pred_check
        %p183 = pneg %p32
      $region26: #{_lambda_.1} parent=23 // pred_check_branch
        %185 = sbr.rel (%p183) target = $region28
      $region27: #{_lambda_.1} parent=23 // pred_region
        %s186 = smul.u32 16, %s12
        %p187 = scmp.lt.s32.totalorder %s186, 31
        %s188 = scalar_select %p187, %s186, 31
        %s189 = smul.addr %s188, 8
        %s190 = scalar_lea.vmem %s0, %s189
        %s191 = smul.u32 16, %s12
      $region28: #{_lambda_.1} parent=23 // pred_fallthru
        _
      // Predicated region
      $region29: #{_lambda_.1} parent=23 // pred_check
        %p192 = pneg %p58
      $region30: #{_lambda_.1} parent=23 // pred_check_branch
        %194 = sbr.rel (%p192) target = $region32
      $region31: #{_lambda_.1} parent=23 // pred_region
        %s195 = smul.u32 16, %s12
        %p196 = scmp.lt.s32.totalorder %s195, 31
        %s197 = scalar_select %p196, %s195, 31
        %s198 = smul.addr %s197, 8
        %s199 = scalar_lea.vmem %s1, %s198
        %s200 = smul.u32 16, %s12
      $region32: #{_lambda_.1} parent=23 // pred_fallthru
        _
    $region24: #{_lambda_.1} parent=5 // pred_fallthru
      _
    %p201 = scmp.le.s32.totalorder 1, %s12
    %p202 = scmp.lt.s32.totalorder %s12, 3
    %p203 = pnand %p201, %p202
    %p204 = pneg %p203
    // Predicated region
    $region33: #{_lambda_.1} parent=5 // pred_check
      _
    $region34: #{_lambda_.1} parent=5 // pred_check_branch
      %206 = sbr.rel (%p203) target = $region36
    $region35: #{_lambda_.1} parent=5 // pred_region
      %s207 = ssub.s32 %s12, 1
      %s208 = smul.u32 16, %s17
      %p209 = scmp.lt.s32.totalorder %s208, 31
      %s210 = scalar_select %p209, %s208, 31
      %s211 = smul.addr %s210, 8
      %s212 = scalar_lea.vmem %s0, %s211
      %p213 = pneg %p38
      %p214 = pneg %p35
      %s215 = smul.u32 16, %s17
      %p216 = scmp.lt.s32.totalorder %s215, 31
      %s217 = scalar_select %p216, %s215, 31
      %s218 = smul.addr %s217, 8
      %s219 = scalar_lea.vmem %s1, %s218
      %p220 = pneg %p64
      %p221 = pneg %p61
      %p222 = pneg %p85
      %p223 = pneg %p82
      %p224 = pneg %p106
      %p225 = pneg %p103
      %p226 = pneg %p132
      %p227 = pneg %p129
      %s228 = smul.u32 16, %s17
      %p229 = scmp.lt.s32.totalorder %s228, 31
      %s230 = scalar_select %p229, %s228, 31
      %s231 = smul.addr %s230, 8
      %s232 = scalar_lea.vmem %s4, %s231
      %p233 = pneg %p158
      %p234 = pneg %p155
      %s235 = smul.u32 16, %s17
      %p236 = scmp.lt.s32.totalorder %s235, 31
      %s237 = scalar_select %p236, %s235, 31
      %s238 = smul.addr %s237, 8
      %s239 = scalar_lea.vmem %s5, %s238
      %s240 = smul.u32 16, %s17
      %p241 = scmp.lt.s32.totalorder %s240, 31
      %s242 = scalar_select %p241, %s240, 31
      %s243 = smul.addr %s242, 8
      %s244 = scalar_lea.vmem %s0, %s243
      %s245 = smul.u32 16, %s17
      %s246 = smul.u32 16, %s17
      %p247 = scmp.lt.s32.totalorder %s246, 31
      %s248 = scalar_select %p247, %s246, 31
      %s249 = smul.addr %s248, 8
      %s250 = scalar_lea.vmem %s1, %s249
      %s251 = smul.u32 16, %s17
      %s252 = smul.u32 16, %s17
      %p253 = scmp.lt.s32.totalorder %s252, 31
      %s254 = scalar_select %p253, %s252, 31
      %s255 = smul.addr %s254, 8
      %s256 = scalar_lea.vmem %s4, %s255
      %s257 = smul.u32 16, %s17
      %s258 = smul.u32 16, %s17
      %p259 = scmp.lt.s32.totalorder %s258, 31
      %s260 = scalar_select %p259, %s258, 31
      %s261 = smul.addr %s260, 8
      %s262 = scalar_lea.vmem %s5, %s261
      %s263 = smul.u32 16, %s17
      %v265 = vld [vmem:[%s244] sm:$0xff]
      %v266 = vld [vmem:[%s244 + $0x8] sm:$0xff]
      %v267 = vld [vmem:[%s244 + $0x10] sm:$0xff]
      %v268 = vld [vmem:[%s244 + $0x18] sm:$0xff]
      %v269 = vld [vmem:[%s244 + $0x20] sm:$0xff]
      %v270 = vld [vmem:[%s244 + $0x28] sm:$0xff]
      %v271 = vld [vmem:[%s244 + $0x30] sm:$0xff]
      %v272 = vld [vmem:[%s244 + $0x38] sm:$0xff]
      %v273 = vld [vmem:[%s244 + $0x40] sm:$0xff]
      %v274 = vld [vmem:[%s244 + $0x48] sm:$0xff]
      %v275 = vld [vmem:[%s244 + $0x50] sm:$0xff]
      %v276 = vld [vmem:[%s244 + $0x58] sm:$0xff]
      %v277 = vld [vmem:[%s244 + $0x60] sm:$0xff]
      %v278 = vld [vmem:[%s244 + $0x68] sm:$0xff]
      %v279 = vld [vmem:[%s244 + $0x70] sm:$0xff]
      %v280 = vld [vmem:[%s244 + $0x78] sm:$0xff]
      %v281 = vld [vmem:[%s250] sm:$0xff]
      %v282 = vld [vmem:[%s250 + $0x8] sm:$0xff]
      %v283 = vld [vmem:[%s250 + $0x10] sm:$0xff]
      %v284 = vld [vmem:[%s250 + $0x18] sm:$0xff]
      %v285 = vld [vmem:[%s250 + $0x20] sm:$0xff]
      %v286 = vld [vmem:[%s250 + $0x28] sm:$0xff]
      %v287 = vld [vmem:[%s250 + $0x30] sm:$0xff]
      %v288 = vld [vmem:[%s250 + $0x38] sm:$0xff]
      %v289 = vld [vmem:[%s250 + $0x40] sm:$0xff]
      %v290 = vld [vmem:[%s250 + $0x48] sm:$0xff]
      %v291 = vld [vmem:[%s250 + $0x50] sm:$0xff]
      %v292 = vld [vmem:[%s250 + $0x58] sm:$0xff]
      %v293 = vld [vmem:[%s250 + $0x60] sm:$0xff]
      %v294 = vld [vmem:[%s250 + $0x68] sm:$0xff]
      %v295 = vld [vmem:[%s250 + $0x70] sm:$0xff]
      %v296 = vld [vmem:[%s250 + $0x78] sm:$0xff]
      %v297 = vld [vmem:[%s2] sm:$0xf]
      %v298 = vld [vmem:[%s2 + $0x4] sm:$0xf]
      %v299 = vld [vmem:[%s2 + $0x8] sm:$0xf]
      %v300 = vld [vmem:[%s2 + $0xc] sm:$0xf]
      %v301 = vld [vmem:[%s2 + $0x10] sm:$0xf]
      %v302 = vld [vmem:[%s2 + $0x14] sm:$0xf]
      %v303 = vld [vmem:[%s2 + $0x18] sm:$0xf]
      %v304 = vld [vmem:[%s2 + $0x1c] sm:$0xf]
      %v305 = vld [vmem:[%s3] sm:$0x1]
      %v306 = vpack.c.bf16 %v266, %v265
      %v307 = vpack.c.bf16 %v268, %v267
      %v308 = vpack.c.bf16 %v270, %v269
      %v309 = vpack.c.bf16 %v272, %v271
      %v310 = vpack.c.bf16 %v274, %v273
      %v311 = vpack.c.bf16 %v276, %v275
      %v312 = vpack.c.bf16 %v278, %v277
      %v313 = vpack.c.bf16 %v280, %v279
      %v322 = vunpack.c.l.b16 %v297
      %v323 = vunpack.c.l.b16 %v298
      %v324 = vunpack.c.l.b16 %v299
      %v325 = vunpack.c.l.b16 %v300
      %v326 = vunpack.c.l.b16 %v301
      %v327 = vunpack.c.l.b16 %v302
      %v328 = vunpack.c.l.b16 %v303
      %v329 = vunpack.c.l.b16 %v304
      %v330 = vpack.c.b16 %v323, %v322
      %v331 = vpack.c.b16 %v325, %v324
      %v332 = vpack.c.b16 %v327, %v326
      %v333 = vpack.c.b16 %v329, %v328
      %vm338 = vcmask 523264
      %v340 = vsel %vm338, %v306, 0
      %v343 = vsel %vm338, %v307, 0
      %v346 = vsel %vm338, %v308, 0
      %v349 = vsel %vm338, %v309, 0
      %v352 = vsel %vm338, %v310, 0
      %v355 = vsel %vm338, %v311, 0
      %v358 = vsel %vm338, %v312, 0
      %v361 = vsel %vm338, %v313, 0
      %363 = vmatprep.subr.bf16.mxu0 0
      %364 = vmatpush1.bf16.msra.mxu0 %v330
      %365 = vmatprep.subr.bf16.mxu0 0
      %366 = vmatpush1.bf16.msra.mxu0 %v331
      %367 = vmatprep.subr.bf16.mxu0 0
      %368 = vmatpush1.bf16.msra.mxu0 %v332
      %369 = vmatprep.subr.bf16.mxu0 0
      %370 = vmatpush1.bf16.msra.mxu0 %v333
      %371 = vmatprep.subr.bf16.mxu0 0
      %372 = vmatpush1.bf16.msra.mxu0 0
      %373 = vmatprep.subr.bf16.mxu0 0
      %374 = vmatpush1.bf16.msra.mxu0 0
      %375 = vmatprep.subr.bf16.mxu0 0
      %376 = vmatpush1.bf16.msra.mxu0 0
      %377 = vmatprep.subr.bf16.mxu0 0
      %378 = vmatpush1.bf16.msra.mxu0 0
      %379 = vmatprep.subr.bf16.mxu0 0
      %380 = vmatpush1.bf16.msra.mxu0 0
      %381 = vmatprep.subr.bf16.mxu0 0
      %382 = vmatpush1.bf16.msra.mxu0 0
      %383 = vmatprep.subr.bf16.mxu0 0
      %384 = vmatpush1.bf16.msra.mxu0 0
      %385 = vmatprep.subr.bf16.mxu0 0
      %386 = vmatpush1.bf16.msra.mxu0 0
      %387 = vmatprep.subr.bf16.mxu0 0
      %388 = vmatpush1.bf16.msra.mxu0 0
      %389 = vmatprep.subr.bf16.mxu0 0
      %390 = vmatpush1.bf16.msra.mxu0 0
      %391 = vmatprep.subr.bf16.mxu0 0
      %392 = vmatpush1.bf16.msra.mxu0 0
      %393 = vmatprep.subr.bf16.mxu0 0
      %394 = vmatpush1.bf16.msra.mxu0 0
      %395 = vmatprep.mubr.bf16.mxu0 0
      %396 = vmatmul.mubr.bf16.gmra.mrb[0].mxu0 %v340
      %v397 = vpop.f32.mrb[0].mxu0
      %v398 = vadd.f32 0.0, %v397
      %v399 = vpop.f32.mrb[0].mxu0
      %v400 = vpop.f32.mrb[0].mxu0
      %v401 = vadd.f32 0.0, %v400
      %v402 = vpop.f32.mrb[0].mxu0
      %403 = vmatprep.mubr.bf16.mxu0 0
      %404 = vmatmul.mubr.bf16.gmra.mrb[0].mxu0 %v343
      %v405 = vpop.f32.mrb[0].mxu0
      %v406 = vadd.f32 0.0, %v405
      %v407 = vpop.f32.mrb[0].mxu0
      %v408 = vpop.f32.mrb[0].mxu0
      %v409 = vadd.f32 0.0, %v408
      %v410 = vpop.f32.mrb[0].mxu0
      %411 = vmatprep.mubr.bf16.mxu0 0
      %412 = vmatmul.mubr.bf16.gmra.mrb[0].mxu0 %v346
      %v413 = vpop.f32.mrb[0].mxu0
      %v414 = vadd.f32 0.0, %v413
      %v415 = vpop.f32.mrb[0].mxu0
      %v416 = vpop.f32.mrb[0].mxu0
      %v417 = vadd.f32 0.0, %v416
      %v418 = vpop.f32.mrb[0].mxu0
      %419 = vmatprep.mubr.bf16.mxu0 0
      %420 = vmatmul.mubr.bf16.gmra.mrb[0].mxu0 %v349
      %v421 = vpop.f32.mrb[0].mxu0
      %v422 = vadd.f32 0.0, %v421
      %v423 = vpop.f32.mrb[0].mxu0
      %v424 = vpop.f32.mrb[0].mxu0
      %v425 = vadd.f32 0.0, %v424
      %v426 = vpop.f32.mrb[0].mxu0
      %427 = vmatprep.mubr.bf16.mxu0 0
      %428 = vmatmul.mubr.bf16.gmra.mrb[0].mxu0 %v352
      %v429 = vpop.f32.mrb[0].mxu0
      %v430 = vadd.f32 0.0, %v429
      %v431 = vpop.f32.mrb[0].mxu0
      %v432 = vpop.f32.mrb[0].mxu0
      %v433 = vadd.f32 0.0, %v432
      %v434 = vpop.f32.mrb[0].mxu0
      %435 = vmatprep.mubr.bf16.mxu0 0
      %436 = vmatmul.mubr.bf16.gmra.mrb[0].mxu0 %v355
      %v437 = vpop.f32.mrb[0].mxu0
      %v438 = vadd.f32 0.0, %v437
      %v439 = vpop.f32.mrb[0].mxu0
      %v440 = vpop.f32.mrb[0].mxu0
      %v441 = vadd.f32 0.0, %v440
      %v442 = vpop.f32.mrb[0].mxu0
      %443 = vmatprep.mubr.bf16.mxu0 0
      %444 = vmatmul.mubr.bf16.gmra.mrb[0].mxu0 %v358
      %v445 = vpop.f32.mrb[0].mxu0
      %v446 = vadd.f32 0.0, %v445
      %v447 = vpop.f32.mrb[0].mxu0
      %v448 = vpop.f32.mrb[0].mxu0
      %v449 = vadd.f32 0.0, %v448
      %v450 = vpop.f32.mrb[0].mxu0
      %451 = vmatprep.mubr.bf16.mxu0 0
      %452 = vmatmul.mubr.bf16.gmra.mrb[0].mxu0 %v361
      %v453 = vpop.f32.mrb[0].mxu0
      %v454 = vadd.f32 0.0, %v453
      %v455 = vpop.f32.mrb[0].mxu0
      %v456 = vpop.f32.mrb[0].mxu0
      %v457 = vadd.f32 0.0, %v456
      %v458 = vpop.f32.mrb[0].mxu0
      %459 = vdwg.mxu0
      %v460 = vtanh.pop %v398
      %v461 = vtanh.pop %v401
      %v462 = vtanh.pop %v406
      %v463 = vtanh.pop %v409
      %v464 = vtanh.pop %v414
      %v465 = vtanh.pop %v417
      %v466 = vtanh.pop %v422
      %v467 = vtanh.pop %v425
      %v468 = vtanh.pop %v430
      %v469 = vtanh.pop %v433
      %v470 = vtanh.pop %v438
      %v471 = vtanh.pop %v441
      %v472 = vtanh.pop %v446
      %v473 = vtanh.pop %v449
      %v474 = vtanh.pop %v454
      %v475 = vtanh.pop %v457
      %v477 = vlaneseq
      %v478 = vshrl.u32 %v477, 7
      %v479 = vsub.s32 0, %v478
      %v480 = vrot.slane %v305, %v479
      %v482 = vmul.f32 %v460, %v480
      %v483 = vmul.f32 %v461, %v480
      %v484 = vmul.f32 %v462, %v480
      %v485 = vmul.f32 %v463, %v480
      %v486 = vmul.f32 %v464, %v480
      %v487 = vmul.f32 %v465, %v480
      %v488 = vmul.f32 %v466, %v480
      %v489 = vmul.f32 %v467, %v480
      %v490 = vmul.f32 %v468, %v480
      %v491 = vmul.f32 %v469, %v480
      %v492 = vmul.f32 %v470, %v480
      %v493 = vmul.f32 %v471, %v480
      %v494 = vmul.f32 %v472, %v480
      %v495 = vmul.f32 %v473, %v480
      %v496 = vmul.f32 %v474, %v480
      %v497 = vmul.f32 %v475, %v480
      %vm498 = vcmask 261120
      %v499 = vsel %vm498, %v482, 0.0
      %500 = vadd.xlane.f32.xlu0 %v499
      %v501 = vpop.xlane.xlu0 %500
      %v502 = vsel %vm498, %v483, 0.0
      %503 = vadd.xlane.f32.xlu0 %v502
      %v504 = vpop.xlane.xlu0 %503
      %v505 = vsel %vm498, %v484, 0.0
      %506 = vadd.xlane.f32.xlu0 %v505
      %v507 = vpop.xlane.xlu0 %506
      %v508 = vsel %vm498, %v485, 0.0
      %509 = vadd.xlane.f32.xlu0 %v508
      %v510 = vpop.xlane.xlu0 %509
      %v511 = vsel %vm498, %v486, 0.0
      %512 = vadd.xlane.f32.xlu0 %v511
      %v513 = vpop.xlane.xlu0 %512
      %v514 = vsel %vm498, %v487, 0.0
      %515 = vadd.xlane.f32.xlu0 %v514
      %v516 = vpop.xlane.xlu0 %515
      %v517 = vsel %vm498, %v488, 0.0
      %518 = vadd.xlane.f32.xlu0 %v517
      %v519 = vpop.xlane.xlu0 %518
      %v520 = vsel %vm498, %v489, 0.0
      %521 = vadd.xlane.f32.xlu0 %v520
      %v522 = vpop.xlane.xlu0 %521
      %v523 = vsel %vm498, %v490, 0.0
      %524 = vadd.xlane.f32.xlu0 %v523
      %v525 = vpop.xlane.xlu0 %524
      %v526 = vsel %vm498, %v491, 0.0
      %527 = vadd.xlane.f32.xlu0 %v526
      %v528 = vpop.xlane.xlu0 %527
      %v529 = vsel %vm498, %v492, 0.0
      %530 = vadd.xlane.f32.xlu0 %v529
      %v531 = vpop.xlane.xlu0 %530
      %v532 = vsel %vm498, %v493, 0.0
      %533 = vadd.xlane.f32.xlu0 %v532
      %v534 = vpop.xlane.xlu0 %533
      %v535 = vsel %vm498, %v494, 0.0
      %536 = vadd.xlane.f32.xlu0 %v535
      %v537 = vpop.xlane.xlu0 %536
      %v538 = vsel %vm498, %v495, 0.0
      %539 = vadd.xlane.f32.xlu0 %v538
      %v540 = vpop.xlane.xlu0 %539
      %v541 = vsel %vm498, %v496, 0.0
      %542 = vadd.xlane.f32.xlu0 %v541
      %v543 = vpop.xlane.xlu0 %542
      %v544 = vsel %vm498, %v497, 0.0
      %545 = vadd.xlane.f32.xlu0 %v544
      %v546 = vpop.xlane.xlu0 %545
      %v547 = vadd.f32 %v501, 1e-06
      %v548 = vadd.f32 %v504, 1e-06
      %v549 = vadd.f32 %v507, 1e-06
      %v550 = vadd.f32 %v510, 1e-06
      %v551 = vadd.f32 %v513, 1e-06
      %v552 = vadd.f32 %v516, 1e-06
      %v553 = vadd.f32 %v519, 1e-06
      %v554 = vadd.f32 %v522, 1e-06
      %v555 = vadd.f32 %v525, 1e-06
      %v556 = vadd.f32 %v528, 1e-06
      %v557 = vadd.f32 %v531, 1e-06
      %v558 = vadd.f32 %v534, 1e-06
      %v559 = vadd.f32 %v537, 1e-06
      %v560 = vadd.f32 %v540, 1e-06
      %v561 = vadd.f32 %v543, 1e-06
      %v562 = vadd.f32 %v546, 1e-06
      %v563 = vpack.c.bf16 %v282, %v281
      %v564 = vpack.c.bf16 %v284, %v283
      %v565 = vpack.c.bf16 %v286, %v285
      %v566 = vpack.c.bf16 %v288, %v287
      %v567 = vpack.c.bf16 %v290, %v289
      %v568 = vpack.c.bf16 %v292, %v291
      %v569 = vpack.c.bf16 %v294, %v293
      %v570 = vpack.c.bf16 %v296, %v295
      %v572 = vsel %vm338, %v563, 0
      %v575 = vsel %vm338, %v564, 0
      %v578 = vsel %vm338, %v565, 0
      %v581 = vsel %vm338, %v566, 0
      %v584 = vsel %vm338, %v567, 0
      %v587 = vsel %vm338, %v568, 0
      %v590 = vsel %vm338, %v569, 0
      %v593 = vsel %vm338, %v570, 0
      %595 = vmatprep.subr.bf16.mxu0 0
      %596 = vmatpush1.bf16.msra.mxu0 %v330
      %597 = vmatprep.subr.bf16.mxu0 0
      %598 = vmatpush1.bf16.msra.mxu0 %v331
      %599 = vmatprep.subr.bf16.mxu0 0
      %600 = vmatpush1.bf16.msra.mxu0 %v332
      %601 = vmatprep.subr.bf16.mxu0 0
      %602 = vmatpush1.bf16.msra.mxu0 %v333
      %603 = vmatprep.subr.bf16.mxu0 0
      %604 = vmatpush1.bf16.msra.mxu0 0
      %605 = vmatprep.subr.bf16.mxu0 0
      %606 = vmatpush1.bf16.msra.mxu0 0
      %607 = vmatprep.subr.bf16.mxu0 0
      %608 = vmatpush1.bf16.msra.mxu0 0
      %609 = vmatprep.subr.bf16.mxu0 0
      %610 = vmatpush1.bf16.msra.mxu0 0
      %611 = vmatprep.subr.bf16.mxu0 0
      %612 = vmatpush1.bf16.msra.mxu0 0
      %613 = vmatprep.subr.bf16.mxu0 0
      %614 = vmatpush1.bf16.msra.mxu0 0
      %615 = vmatprep.subr.bf16.mxu0 0
      %616 = vmatpush1.bf16.msra.mxu0 0
      %617 = vmatprep.subr.bf16.mxu0 0
      %618 = vmatpush1.bf16.msra.mxu0 0
      %619 = vmatprep.subr.bf16.mxu0 0
      %620 = vmatpush1.bf16.msra.mxu0 0
      %621 = vmatprep.subr.bf16.mxu0 0
      %622 = vmatpush1.bf16.msra.mxu0 0
      %623 = vmatprep.subr.bf16.mxu0 0
      %624 = vmatpush1.bf16.msra.mxu0 0
      %625 = vmatprep.subr.bf16.mxu0 0
      %626 = vmatpush1.bf16.msra.mxu0 0
      %627 = vmatprep.mubr.bf16.mxu0 0
      %628 = vmatmul.mubr.bf16.gmra.mrb[0].mxu0 %v572
      %v629 = vpop.f32.mrb[0].mxu0
      %v630 = vadd.f32 0.0, %v629
      %v631 = vpop.f32.mrb[0].mxu0
      %v632 = vpop.f32.mrb[0].mxu0
      %v633 = vadd.f32 0.0, %v632
      %v634 = vpop.f32.mrb[0].mxu0
      %635 = vmatprep.mubr.bf16.mxu0 0
      %636 = vmatmul.mubr.bf16.gmra.mrb[0].mxu0 %v575
      %v637 = vpop.f32.mrb[0].mxu0
      %v638 = vadd.f32 0.0, %v637
      %v639 = vpop.f32.mrb[0].mxu0
      %v640 = vpop.f32.mrb[0].mxu0
      %v641 = vadd.f32 0.0, %v640
      %v642 = vpop.f32.mrb[0].mxu0
      %643 = vmatprep.mubr.bf16.mxu0 0
      %644 = vmatmul.mubr.bf16.gmra.mrb[0].mxu0 %v578
      %v645 = vpop.f32.mrb[0].mxu0
      %v646 = vadd.f32 0.0, %v645
      %v647 = vpop.f32.mrb[0].mxu0
      %v648 = vpop.f32.mrb[0].mxu0
      %v649 = vadd.f32 0.0, %v648
      %v650 = vpop.f32.mrb[0].mxu0
      %651 = vmatprep.mubr.bf16.mxu0 0
      %652 = vmatmul.mubr.bf16.gmra.mrb[0].mxu0 %v581
      %v653 = vpop.f32.mrb[0].mxu0
      %v654 = vadd.f32 0.0, %v653
      %v655 = vpop.f32.mrb[0].mxu0
      %v656 = vpop.f32.mrb[0].mxu0
      %v657 = vadd.f32 0.0, %v656
      %v658 = vpop.f32.mrb[0].mxu0
      %659 = vmatprep.mubr.bf16.mxu0 0
      %660 = vmatmul.mubr.bf16.gmra.mrb[0].mxu0 %v584
      %v661 = vpop.f32.mrb[0].mxu0
      %v662 = vadd.f32 0.0, %v661
      %v663 = vpop.f32.mrb[0].mxu0
      %v664 = vpop.f32.mrb[0].mxu0
      %v665 = vadd.f32 0.0, %v664
      %v666 = vpop.f32.mrb[0].mxu0
      %667 = vmatprep.mubr.bf16.mxu0 0
      %668 = vmatmul.mubr.bf16.gmra.mrb[0].mxu0 %v587
      %v669 = vpop.f32.mrb[0].mxu0
      %v670 = vadd.f32 0.0, %v669
      %v671 = vpop.f32.mrb[0].mxu0
      %v672 = vpop.f32.mrb[0].mxu0
      %v673 = vadd.f32 0.0, %v672
      %v674 = vpop.f32.mrb[0].mxu0
      %675 = vmatprep.mubr.bf16.mxu0 0
      %676 = vmatmul.mubr.bf16.gmra.mrb[0].mxu0 %v590
      %v677 = vpop.f32.mrb[0].mxu0
      %v678 = vadd.f32 0.0, %v677
      %v679 = vpop.f32.mrb[0].mxu0
      %v680 = vpop.f32.mrb[0].mxu0
      %v681 = vadd.f32 0.0, %v680
      %v682 = vpop.f32.mrb[0].mxu0
      %683 = vmatprep.mubr.bf16.mxu0 0
      %684 = vmatmul.mubr.bf16.gmra.mrb[0].mxu0 %v593
      %v685 = vpop.f32.mrb[0].mxu0
      %v686 = vadd.f32 0.0, %v685
      %v687 = vpop.f32.mrb[0].mxu0
      %v688 = vpop.f32.mrb[0].mxu0
      %v689 = vadd.f32 0.0, %v688
      %v690 = vpop.f32.mrb[0].mxu0
      %691 = vdwg.mxu0
      %v692 = vtanh.pop %v630
      %v693 = vtanh.pop %v633
      %v694 = vtanh.pop %v638
      %v695 = vtanh.pop %v641
      %v696 = vtanh.pop %v646
      %v697 = vtanh.pop %v649
      %v698 = vtanh.pop %v654
      %v699 = vtanh.pop %v657
      %v700 = vtanh.pop %v662
      %v701 = vtanh.pop %v665
      %v702 = vtanh.pop %v670
      %v703 = vtanh.pop %v673
      %v704 = vtanh.pop %v678
      %v705 = vtanh.pop %v681
      %v706 = vtanh.pop %v686
      %v707 = vtanh.pop %v689
      %v708 = vmul.f32 %v692, %v480
      %v709 = vmul.f32 %v693, %v480
      %v710 = vmul.f32 %v694, %v480
      %v711 = vmul.f32 %v695, %v480
      %v712 = vmul.f32 %v696, %v480
      %v713 = vmul.f32 %v697, %v480
      %v714 = vmul.f32 %v698, %v480
      %v715 = vmul.f32 %v699, %v480
      %v716 = vmul.f32 %v700, %v480
      %v717 = vmul.f32 %v701, %v480
      %v718 = vmul.f32 %v702, %v480
      %v719 = vmul.f32 %v703, %v480
      %v720 = vmul.f32 %v704, %v480
      %v721 = vmul.f32 %v705, %v480
      %v722 = vmul.f32 %v706, %v480
      %v723 = vmul.f32 %v707, %v480
      %v724 = vsel %vm498, %v708, 0.0
      %725 = vadd.xlane.f32.xlu0 %v724
      %v726 = vpop.xlane.xlu0 %725
      %v727 = vsel %vm498, %v709, 0.0
      %728 = vadd.xlane.f32.xlu0 %v727
      %v729 = vpop.xlane.xlu0 %728
      %v730 = vsel %vm498, %v710, 0.0
      %731 = vadd.xlane.f32.xlu0 %v730
      %v732 = vpop.xlane.xlu0 %731
      %v733 = vsel %vm498, %v711, 0.0
      %734 = vadd.xlane.f32.xlu0 %v733
      %v735 = vpop.xlane.xlu0 %734
      %v736 = vsel %vm498, %v712, 0.0
      %737 = vadd.xlane.f32.xlu0 %v736
      %v738 = vpop.xlane.xlu0 %737
      %v739 = vsel %vm498, %v713, 0.0
      %740 = vadd.xlane.f32.xlu0 %v739
      %v741 = vpop.xlane.xlu0 %740
      %v742 = vsel %vm498, %v714, 0.0
      %743 = vadd.xlane.f32.xlu0 %v742
      %v744 = vpop.xlane.xlu0 %743
      %v745 = vsel %vm498, %v715, 0.0
      %746 = vadd.xlane.f32.xlu0 %v745
      %v747 = vpop.xlane.xlu0 %746
      %v748 = vsel %vm498, %v716, 0.0
      %749 = vadd.xlane.f32.xlu0 %v748
      %v750 = vpop.xlane.xlu0 %749
      %v751 = vsel %vm498, %v717, 0.0
      %752 = vadd.xlane.f32.xlu0 %v751
      %v753 = vpop.xlane.xlu0 %752
      %v754 = vsel %vm498, %v718, 0.0
      %755 = vadd.xlane.f32.xlu0 %v754
      %v756 = vpop.xlane.xlu0 %755
      %v757 = vsel %vm498, %v719, 0.0
      %758 = vadd.xlane.f32.xlu0 %v757
      %v759 = vpop.xlane.xlu0 %758
      %v760 = vsel %vm498, %v720, 0.0
      %761 = vadd.xlane.f32.xlu0 %v760
      %v762 = vpop.xlane.xlu0 %761
      %v763 = vsel %vm498, %v721, 0.0
      %764 = vadd.xlane.f32.xlu0 %v763
      %v765 = vpop.xlane.xlu0 %764
      %v766 = vsel %vm498, %v722, 0.0
      %767 = vadd.xlane.f32.xlu0 %v766
      %v768 = vpop.xlane.xlu0 %767
      %v769 = vsel %vm498, %v723, 0.0
      %770 = vadd.xlane.f32.xlu0 %v769
      %v771 = vpop.xlane.xlu0 %770
      %v772 = vadd.f32 %v726, 1e-06
      %v773 = vadd.f32 %v729, 1e-06
      %v774 = vadd.f32 %v732, 1e-06
      %v775 = vadd.f32 %v735, 1e-06
      %v776 = vadd.f32 %v738, 1e-06
      %v777 = vadd.f32 %v741, 1e-06
      %v778 = vadd.f32 %v744, 1e-06
      %v779 = vadd.f32 %v747, 1e-06
      %v780 = vadd.f32 %v750, 1e-06
      %v781 = vadd.f32 %v753, 1e-06
      %v782 = vadd.f32 %v756, 1e-06
      %v783 = vadd.f32 %v759, 1e-06
      %v784 = vadd.f32 %v762, 1e-06
      %v785 = vadd.f32 %v765, 1e-06
      %v786 = vadd.f32 %v768, 1e-06
      %v787 = vadd.f32 %v771, 1e-06
      %v788 = vmax.f32 %v547, %v772
      %v789 = vmax.f32 %v548, %v773
      %v790 = vmax.f32 %v549, %v774
      %v791 = vmax.f32 %v550, %v775
      %v792 = vmax.f32 %v551, %v776
      %v793 = vmax.f32 %v552, %v777
      %v794 = vmax.f32 %v553, %v778
      %v795 = vmax.f32 %v554, %v779
      %v796 = vmax.f32 %v555, %v780
      %v797 = vmax.f32 %v556, %v781
      %v798 = vmax.f32 %v557, %v782
      %v799 = vmax.f32 %v558, %v783
      %v800 = vmax.f32 %v559, %v784
      %v801 = vmax.f32 %v560, %v785
      %v802 = vmax.f32 %v561, %v786
      %v803 = vmax.f32 %v562, %v787
      %v804 = vsub.f32 %v547, %v788
      %v805 = vsub.f32 %v548, %v789
      %v806 = vsub.f32 %v549, %v790
      %v807 = vsub.f32 %v550, %v791
      %v808 = vsub.f32 %v551, %v792
      %v809 = vsub.f32 %v552, %v793
      %v810 = vsub.f32 %v553, %v794
      %v811 = vsub.f32 %v554, %v795
      %v812 = vsub.f32 %v555, %v796
      %v813 = vsub.f32 %v556, %v797
      %v814 = vsub.f32 %v557, %v798
      %v815 = vsub.f32 %v558, %v799
      %v816 = vsub.f32 %v559, %v800
      %v817 = vsub.f32 %v560, %v801
      %v818 = vsub.f32 %v561, %v802
      %v819 = vsub.f32 %v562, %v803
      %v820 = vmul.f32 %v804, 1.442695
      %v821 = vpow.pop %v820
      %v822 = vmul.f32 %v805, 1.442695
      %v823 = vpow.pop %v822
      %v824 = vmul.f32 %v806, 1.442695
      %v825 = vpow.pop %v824
      %v826 = vmul.f32 %v807, 1.442695
      %v827 = vpow.pop %v826
      %v828 = vmul.f32 %v808, 1.442695
      %v829 = vpow.pop %v828
      %v830 = vmul.f32 %v809, 1.442695
      %v831 = vpow.pop %v830
      %v832 = vmul.f32 %v810, 1.442695
      %v833 = vpow.pop %v832
      %v834 = vmul.f32 %v811, 1.442695
      %v835 = vpow.pop %v834
      %v836 = vmul.f32 %v812, 1.442695
      %v837 = vpow.pop %v836
      %v838 = vmul.f32 %v813, 1.442695
      %v839 = vpow.pop %v838
      %v840 = vmul.f32 %v814, 1.442695
      %v841 = vpow.pop %v840
      %v842 = vmul.f32 %v815, 1.442695
      %v843 = vpow.pop %v842
      %v844 = vmul.f32 %v816, 1.442695
      %v845 = vpow.pop %v844
      %v846 = vmul.f32 %v817, 1.442695
      %v847 = vpow.pop %v846
      %v848 = vmul.f32 %v818, 1.442695
      %v849 = vpow.pop %v848
      %v850 = vmul.f32 %v819, 1.442695
      %v851 = vpow.pop %v850
      %v852 = vsub.f32 %v772, %v788
      %v853 = vsub.f32 %v773, %v789
      %v854 = vsub.f32 %v774, %v790
      %v855 = vsub.f32 %v775, %v791
      %v856 = vsub.f32 %v776, %v792
      %v857 = vsub.f32 %v777, %v793
      %v858 = vsub.f32 %v778, %v794
      %v859 = vsub.f32 %v779, %v795
      %v860 = vsub.f32 %v780, %v796
      %v861 = vsub.f32 %v781, %v797
      %v862 = vsub.f32 %v782, %v798
      %v863 = vsub.f32 %v783, %v799
      %v864 = vsub.f32 %v784, %v800
      %v865 = vsub.f32 %v785, %v801
      %v866 = vsub.f32 %v786, %v802
      %v867 = vsub.f32 %v787, %v803
      %v868 = vmul.f32 %v852, 1.442695
      %v869 = vpow.pop %v868
      %v870 = vmul.f32 %v853, 1.442695
      %v871 = vpow.pop %v870
      %v872 = vmul.f32 %v854, 1.442695
      %v873 = vpow.pop %v872
      %v874 = vmul.f32 %v855, 1.442695
      %v875 = vpow.pop %v874
      %v876 = vmul.f32 %v856, 1.442695
      %v877 = vpow.pop %v876
      %v878 = vmul.f32 %v857, 1.442695
      %v879 = vpow.pop %v878
      %v880 = vmul.f32 %v858, 1.442695
      %v881 = vpow.pop %v880
      %v882 = vmul.f32 %v859, 1.442695
      %v883 = vpow.pop %v882
      %v884 = vmul.f32 %v860, 1.442695
      %v885 = vpow.pop %v884
      %v886 = vmul.f32 %v861, 1.442695
      %v887 = vpow.pop %v886
      %v888 = vmul.f32 %v862, 1.442695
      %v889 = vpow.pop %v888
      %v890 = vmul.f32 %v863, 1.442695
      %v891 = vpow.pop %v890
      %v892 = vmul.f32 %v864, 1.442695
      %v893 = vpow.pop %v892
      %v894 = vmul.f32 %v865, 1.442695
      %v895 = vpow.pop %v894
      %v896 = vmul.f32 %v866, 1.442695
      %v897 = vpow.pop %v896
      %v898 = vmul.f32 %v867, 1.442695
      %v899 = vpow.pop %v898
      %v900 = vadd.f32 %v821, %v869
      %v901 = vadd.f32 %v823, %v871
      %v902 = vadd.f32 %v825, %v873
      %v903 = vadd.f32 %v827, %v875
      %v904 = vadd.f32 %v829, %v877
      %v905 = vadd.f32 %v831, %v879
      %v906 = vadd.f32 %v833, %v881
      %v907 = vadd.f32 %v835, %v883
      %v908 = vadd.f32 %v837, %v885
      %v909 = vadd.f32 %v839, %v887
      %v910 = vadd.f32 %v841, %v889
      %v911 = vadd.f32 %v843, %v891
      %v912 = vadd.f32 %v845, %v893
      %v913 = vadd.f32 %v847, %v895
      %v914 = vadd.f32 %v849, %v897
      %v915 = vadd.f32 %v851, %v899
      %v916 = vrcp.pop %v900
      %v917 = vrcp.pop %v901
      %v918 = vrcp.pop %v902
      %v919 = vrcp.pop %v903
      %v920 = vrcp.pop %v904
      %v921 = vrcp.pop %v905
      %v922 = vrcp.pop %v906
      %v923 = vrcp.pop %v907
      %v924 = vrcp.pop %v908
      %v925 = vrcp.pop %v909
      %v926 = vrcp.pop %v910
      %v927 = vrcp.pop %v911
      %v928 = vrcp.pop %v912
      %v929 = vrcp.pop %v913
      %v930 = vrcp.pop %v914
      %v931 = vrcp.pop %v915
      %v932 = vmul.f32 %v821, %v916
      %v933 = vmul.f32 %v823, %v917
      %v934 = vmul.f32 %v825, %v918
      %v935 = vmul.f32 %v827, %v919
      %v936 = vmul.f32 %v829, %v920
      %v937 = vmul.f32 %v831, %v921
      %v938 = vmul.f32 %v833, %v922
      %v939 = vmul.f32 %v835, %v923
      %v940 = vmul.f32 %v837, %v924
      %v941 = vmul.f32 %v839, %v925
      %v942 = vmul.f32 %v841, %v926
      %v943 = vmul.f32 %v843, %v927
      %v944 = vmul.f32 %v845, %v928
      %v945 = vmul.f32 %v847, %v929
      %v946 = vmul.f32 %v849, %v930
      %v947 = vmul.f32 %v851, %v931
      %v948 = vmul.f32 %v869, %v916
      %v949 = vmul.f32 %v871, %v917
      %v950 = vmul.f32 %v873, %v918
      %v951 = vmul.f32 %v875, %v919
      %v952 = vmul.f32 %v877, %v920
      %v953 = vmul.f32 %v879, %v921
      %v954 = vmul.f32 %v881, %v922
      %v955 = vmul.f32 %v883, %v923
      %v956 = vmul.f32 %v885, %v924
      %v957 = vmul.f32 %v887, %v925
      %v958 = vmul.f32 %v889, %v926
      %v959 = vmul.f32 %v891, %v927
      %v960 = vmul.f32 %v893, %v928
      %v961 = vmul.f32 %v895, %v929
      %v962 = vmul.f32 %v897, %v930
      %v963 = vmul.f32 %v899, %v931
      %v964 = vmul.f32 %v932, %v265
      %v965 = vmul.f32 %v933, %v266
      %v966 = vmul.f32 %v934, %v267
      %v967 = vmul.f32 %v935, %v268
      %v968 = vmul.f32 %v936, %v269
      %v969 = vmul.f32 %v937, %v270
      %v970 = vmul.f32 %v938, %v271
      %v971 = vmul.f32 %v939, %v272
      %v972 = vmul.f32 %v940, %v273
      %v973 = vmul.f32 %v941, %v274
      %v974 = vmul.f32 %v942, %v275
      %v975 = vmul.f32 %v943, %v276
      %v976 = vmul.f32 %v944, %v277
      %v977 = vmul.f32 %v945, %v278
      %v978 = vmul.f32 %v946, %v279
      %v979 = vmul.f32 %v947, %v280
      %v980 = vmul.f32 %v948, %v281
      %v981 = vmul.f32 %v949, %v282
      %v982 = vmul.f32 %v950, %v283
      %v983 = vmul.f32 %v951, %v284
      %v984 = vmul.f32 %v952, %v285
      %v985 = vmul.f32 %v953, %v286
      %v986 = vmul.f32 %v954, %v287
      %v987 = vmul.f32 %v955, %v288
      %v988 = vmul.f32 %v956, %v289
      %v989 = vmul.f32 %v957, %v290
      %v990 = vmul.f32 %v958, %v291
      %v991 = vmul.f32 %v959, %v292
      %v992 = vmul.f32 %v960, %v293
      %v993 = vmul.f32 %v961, %v294
      %v994 = vmul.f32 %v962, %v295
      %v995 = vmul.f32 %v963, %v296
      %v996 = vadd.f32 %v964, %v980
      %v997 = vadd.f32 %v965, %v981
      %v998 = vadd.f32 %v966, %v982
      %v999 = vadd.f32 %v967, %v983
      %v1000 = vadd.f32 %v968, %v984
      %v1001 = vadd.f32 %v969, %v985
      %v1002 = vadd.f32 %v970, %v986
      %v1003 = vadd.f32 %v971, %v987
      %v1004 = vadd.f32 %v972, %v988
      %v1005 = vadd.f32 %v973, %v989
      %v1006 = vadd.f32 %v974, %v990
      %v1007 = vadd.f32 %v975, %v991
      %v1008 = vadd.f32 %v976, %v992
      %v1009 = vadd.f32 %v977, %v993
      %v1010 = vadd.f32 %v978, %v994
      %v1011 = vadd.f32 %v979, %v995
      %1012 = vst.msk [vmem:[%s256] sm:$0xff] %vm338, %v996
      %1013 = vst.msk [vmem:[%s256 + $0x8] sm:$0xff] %vm338, %v997
      %1014 = vst.msk [vmem:[%s256 + $0x10] sm:$0xff] %vm338, %v998
      %1015 = vst.msk [vmem:[%s256 + $0x18] sm:$0xff] %vm338, %v999
      %1016 = vst.msk [vmem:[%s256 + $0x20] sm:$0xff] %vm338, %v1000
      %1017 = vst.msk [vmem:[%s256 + $0x28] sm:$0xff] %vm338, %v1001
      %1018 = vst.msk [vmem:[%s256 + $0x30] sm:$0xff] %vm338, %v1002
      %1019 = vst.msk [vmem:[%s256 + $0x38] sm:$0xff] %vm338, %v1003
      %1020 = vst.msk [vmem:[%s256 + $0x40] sm:$0xff] %vm338, %v1004
      %1021 = vst.msk [vmem:[%s256 + $0x48] sm:$0xff] %vm338, %v1005
      %1022 = vst.msk [vmem:[%s256 + $0x50] sm:$0xff] %vm338, %v1006
      %1023 = vst.msk [vmem:[%s256 + $0x58] sm:$0xff] %vm338, %v1007
      %1024 = vst.msk [vmem:[%s256 + $0x60] sm:$0xff] %vm338, %v1008
      %1025 = vst.msk [vmem:[%s256 + $0x68] sm:$0xff] %vm338, %v1009
      %1026 = vst.msk [vmem:[%s256 + $0x70] sm:$0xff] %vm338, %v1010
      %1027 = vst.msk [vmem:[%s256 + $0x78] sm:$0xff] %vm338, %v1011
      %vm1028 = vcmask 7168
      %v1029 = vsel %vm1028, %v932, %v948
      %v1030 = vsel %vm1028, %v933, %v949
      %v1031 = vsel %vm1028, %v934, %v950
      %v1032 = vsel %vm1028, %v935, %v951
      %v1033 = vsel %vm1028, %v936, %v952
      %v1034 = vsel %vm1028, %v937, %v953
      %v1035 = vsel %vm1028, %v938, %v954
      %v1036 = vsel %vm1028, %v939, %v955
      %v1037 = vsel %vm1028, %v940, %v956
      %v1038 = vsel %vm1028, %v941, %v957
      %v1039 = vsel %vm1028, %v942, %v958
      %v1040 = vsel %vm1028, %v943, %v959
      %v1041 = vsel %vm1028, %v944, %v960
      %v1042 = vsel %vm1028, %v945, %v961
      %v1043 = vsel %vm1028, %v946, %v962
      %v1044 = vsel %vm1028, %v947, %v963
      %vm1045 = vcmask 15360
      %1046 = vst.msk [vmem:[%s262] sm:$0xff] %vm1045, %v1029
      %1047 = vst.msk [vmem:[%s262 + $0x8] sm:$0xff] %vm1045, %v1030
      %1048 = vst.msk [vmem:[%s262 + $0x10] sm:$0xff] %vm1045, %v1031
      %1049 = vst.msk [vmem:[%s262 + $0x18] sm:$0xff] %vm1045, %v1032
      %1050 = vst.msk [vmem:[%s262 + $0x20] sm:$0xff] %vm1045, %v1033
      %1051 = vst.msk [vmem:[%s262 + $0x28] sm:$0xff] %vm1045, %v1034
      %1052 = vst.msk [vmem:[%s262 + $0x30] sm:$0xff] %vm1045, %v1035
      %1053 = vst.msk [vmem:[%s262 + $0x38] sm:$0xff] %vm1045, %v1036
      %1054 = vst.msk [vmem:[%s262 + $0x40] sm:$0xff] %vm1045, %v1037
      %1055 = vst.msk [vmem:[%s262 + $0x48] sm:$0xff] %vm1045, %v1038
      %1056 = vst.msk [vmem:[%s262 + $0x50] sm:$0xff] %vm1045, %v1039
      %1057 = vst.msk [vmem:[%s262 + $0x58] sm:$0xff] %vm1045, %v1040
      %1058 = vst.msk [vmem:[%s262 + $0x60] sm:$0xff] %vm1045, %v1041
      %1059 = vst.msk [vmem:[%s262 + $0x68] sm:$0xff] %vm1045, %v1042
      %1060 = vst.msk [vmem:[%s262 + $0x70] sm:$0xff] %vm1045, %v1043
      %1061 = vst.msk [vmem:[%s262 + $0x78] sm:$0xff] %vm1045, %v1044
      %s1062 = smul.u32 16, %s17
      %p1063 = scmp.lt.s32.totalorder %s1062, 31
      %s1064 = scalar_select %p1063, %s1062, 31
      %s1065 = smul.addr %s1064, 8
      %s1066 = scalar_lea.vmem %s4, %s1065
      %s1067 = smul.u32 16, %s17
      %p1068 = scmp.lt.s32.totalorder %s1067, 31
      %s1069 = scalar_select %p1068, %s1067, 31
      %s1070 = smul.addr %s1069, 8
      %s1071 = scalar_lea.vmem %s5, %s1070
      // Predicated region
      $region37: #{_lambda_.1} parent=35 // pred_check
        %p1072 = pneg %p129
      $region38: #{_lambda_.1} parent=35 // pred_check_branch
        %1074 = sbr.rel (%p1072) target = $region40
      $region39: #{_lambda_.1} parent=35 // pred_region
        %s1075 = smul.u32 16, %s17
      $region40: #{_lambda_.1} parent=35 // pred_fallthru
        _
      // Predicated region
      $region41: #{_lambda_.1} parent=35 // pred_check
        %p1076 = pneg %p155
      $region42: #{_lambda_.1} parent=35 // pred_check_branch
        %1078 = sbr.rel (%p1076) target = $region44
      $region43: #{_lambda_.1} parent=35 // pred_region
        %s1079 = smul.u32 16, %s17
      $region44: #{_lambda_.1} parent=35 // pred_fallthru
        _
    $region36: #{_lambda_.1} parent=5 // pred_fallthru
      _
    %p1080 = scmp.le.s32.totalorder 2, %s12
    // Predicated region
    $region45: #{_lambda_.1} parent=5 // pred_check
      %p1081 = pneg %p1080
    $region46: #{_lambda_.1} parent=5 // pred_check_branch
      %1083 = sbr.rel (%p1081) target = $region48
    $region47: #{_lambda_.1} parent=5 // pred_region
      %s1084 = ssub.s32 %s12, 2
      // Predicated region
      $region49: #{_lambda_.1} parent=47 // pred_check
        %p1085 = pneg %p135
      $region50: #{_lambda_.1} parent=47 // pred_check_branch
        %1087 = sbr.rel (%p1085) target = $region52
      $region51: #{_lambda_.1} parent=47 // pred_region
        %s1088 = smul.u32 16, %s18
        %p1089 = scmp.lt.s32.totalorder %s1088, 31
        %s1090 = scalar_select %p1089, %s1088, 31
        %s1091 = smul.addr %s1090, 8
        %s1092 = scalar_lea.vmem %s4, %s1091
      $region52: #{_lambda_.1} parent=47 // pred_fallthru
        _
      // Predicated region
      $region53: #{_lambda_.1} parent=47 // pred_check
        %p1093 = pneg %p161
      $region54: #{_lambda_.1} parent=47 // pred_check_branch
        %1095 = sbr.rel (%p1093) target = $region56
      $region55: #{_lambda_.1} parent=47 // pred_region
        %s1096 = smul.u32 16, %s18
        %p1097 = scmp.lt.s32.totalorder %s1096, 31
        %s1098 = scalar_select %p1097, %s1096, 31
        %s1099 = smul.addr %s1098, 8
        %s1100 = scalar_lea.vmem %s5, %s1099
      $region56: #{_lambda_.1} parent=47 // pred_fallthru
        _
    $region48: #{_lambda_.1} parent=5 // pred_fallthru
      _
  $region6: #{_lambda_.1} parent=0 // loop_footer
    %s16 = sadd.s32 1, %s12
  $region7: #{_lambda_.1} parent=0 // loop_footer_branch
    %11 = sbr.rel target = $region3
  $region8: #{_lambda_.1} parent=0 // loop_exit
    _

</llo_original>
